<compile_context>
chip_gen: v5e
topology: v5e:2x2
jax: 0.10.0
libtpu: 0.0.40
codegen_flags: <defaults>
</compile_context>

<pallas_src>
import functools

import jax
import jax.numpy as jnp
from jax import lax
from jax.experimental import pallas as pl
from jax.experimental.pallas import tpu as pltpu


def ada_layer_norm_kernel(x_ref, scale_ref, shift_ref, o_ref, *, eps, c_valid):
    """LayerNorm over the channel (lane) axis + per-batch affine.

    x_ref:     (block_b, block_t, C_pad)
    scale_ref: (block_b, 1, C_pad)   == 1 + gamma
    shift_ref: (block_b, 1, C_pad)   == beta
    o_ref:     (block_b, block_t, C_pad)
    """
    x = x_ref[...].astype(jnp.float32)
    c_pad = x.shape[-1]

    if c_valid != c_pad:
        # Channel axis was zero-padded up to a lane-dense width: mask the
        # padded lanes out of the reductions, divide by the true C.
        lane = lax.broadcasted_iota(jnp.int32, (1, 1, c_pad), 2)
        mask = (lane < c_valid).astype(jnp.float32)
        inv_c = 1.0 / float(c_valid)
        xm = x * mask
        mean = jnp.sum(xm, axis=-1, keepdims=True) * inv_c
        xc = (xm - mean) * mask
        var = jnp.sum(xc * xc, axis=-1, keepdims=True) * inv_c
    else:
        # Two-pass form kept on purpose (numerically safer than E[x^2]-mean^2
        # for large-magnitude activations); kernel is HBM-bandwidth bound so
        # the extra VPU subtraction is not on the binding slot.
        mean = jnp.mean(x, axis=-1, keepdims=True)
        xc = x - mean
        var = jnp.mean(xc * xc, axis=-1, keepdims=True)

    xn = xc * lax.rsqrt(var + eps)                      # EUP rsqrt
    scale = scale_ref[...].astype(jnp.float32)          # (bb, 1, C) broadcast over T
    shift = shift_ref[...].astype(jnp.float32)
    o_ref[...] = (scale * xn + shift).astype(o_ref.dtype)


def _pick_tiles(B, T, c_pad, itemsize, block_b=None, block_t=None):
    """Choose (block_b, block_t) so one I/O tile is ~2 MiB and grid >= 2 steps."""
    sublane = {4: 8, 2: 16, 1: 32}.get(itemsize, 8)

    if block_t is not None:
        bt = min(block_t, T)
        if bt < T:
            bt = max(sublane, (bt // sublane) * sublane)
        bb = 1 if block_b is None else max(1, min(block_b, B))
        return bb, bt

    target_bytes = 2 << 20            # ~2 MiB tile: big enough to amortize the
    row_bytes = c_pad * itemsize      # ~0.35 us/step overhead, small enough for
    rows = max(1, target_bytes // row_bytes)  # v5e's 16 MiB scoped VMEM.
    if rows >= T:
        bt = T                                        # full T (any length is legal)
        bb = max(1, min(B, rows // max(T, 1)))        # fold batches into the tile
    else:
        bt = min(T, max(sublane, (rows // sublane) * sublane))
        bb = 1
    if block_b is not None:
        bb = max(1, min(block_b, B))

    # v7x megacore: both grid axes are "parallel"; keep >= 2 steps when possible.
    def nsteps(bb_, bt_):
        return -(-B // bb_) * -(-T // bt_)

    while nsteps(bb, bt) < 2:
        if bb > 1:
            bb = max(1, bb // 2)
        elif bt == T and T > sublane:
            half = max(sublane, ((T // 2) // sublane) * sublane)
            if half >= T:
                break
            bt = half
        else:
            break
    return bb, bt


def ada_layer_norm(x, s, w, b, *, eps=1e-5, block_b=None, block_t=None):
    """x: (B, T, C), s: (B, S), w: (S, 2C), b: (2C,) -> (B, T, C)."""
    B, T, C = x.shape

    # Style FC hoisted to one XLA matmul.  No explicit upcasts: rely on
    # preferred_element_type so bf16 params use the native bf16 MXU path.
    h = jnp.dot(s, w, preferred_element_type=jnp.float32) + b.astype(jnp.float32)
    scale = (1.0 + h[:, :C]).reshape(B, 1, C)          # (B, 1, C) f32 == 1 + gamma
    shift = h[:, C:].reshape(B, 1, C)                  # (B, 1, C) f32 == beta

    # Lane-dense channel axis: pad C to a multiple of 128 (pad, run, slice) so
    # output rows are full-width vst instead of masked partial stores.
    c_pad = ((C + 127) // 128) * 128
    if c_pad != C:
        pc = c_pad - C
        x_in = jnp.pad(x, ((0, 0), (0, 0), (0, pc)))
        scale = jnp.pad(scale, ((0, 0), (0, 0), (0, pc)))
        shift = jnp.pad(shift, ((0, 0), (0, 0), (0, pc)))
    else:
        x_in = x

    itemsize = jnp.dtype(x.dtype).itemsize
    bb, bt = _pick_tiles(B, T, c_pad, itemsize, block_b, block_t)
    grid = (pl.cdiv(B, bb), pl.cdiv(T, bt))

    # VMEM budget: 2x double-buffered input + output tiles (x dtype) plus ~3
    # full-tile f32 temporaries; cap the limit at 48 MiB (v7x: 64 MiB physical).
    tile_elems = bb * bt * c_pad
    vmem_need = tile_elems * (4 * itemsize + 12) + 8 * bb * c_pad * 4
    vmem_limit = int(min(max(2 * vmem_need, 32 << 20), 48 << 20))

    cost = pl.CostEstimate(
        flops=8 * B * T * c_pad,
        transcendentals=B * T,
        bytes_accessed=2 * B * T * c_pad * itemsize + 2 * B * c_pad * 4,
    )

    kernel = functools.partial(ada_layer_norm_kernel, eps=eps, c_valid=C)

    out = pl.pallas_call(
        kernel,
        out_shape=jax.ShapeDtypeStruct((B, T, c_pad), x.dtype),
        grid_spec=pltpu.PrefetchScalarGridSpec(
            num_scalar_prefetch=0,
            grid=grid,
            in_specs=[
                pl.BlockSpec((bb, bt, c_pad), lambda bi, ti: (bi, ti, 0)),  # x tile
                pl.BlockSpec((bb, 1, c_pad), lambda bi, ti: (bi, 0, 0)),    # 1+gamma
                pl.BlockSpec((bb, 1, c_pad), lambda bi, ti: (bi, 0, 0)),    # beta
            ],
            out_specs=pl.BlockSpec((bb, bt, c_pad), lambda bi, ti: (bi, ti, 0)),
        ),
        compiler_params=pltpu.CompilerParams(
            dimension_semantics=("parallel", "parallel"),
            vmem_limit_bytes=vmem_limit),
        cost_estimate=cost,
    )(x_in, scale, shift)

    if c_pad != C:
        out = out[:, :, :C]
    return out


def reference(x, s, w, b, *, eps=1e-5):
    # Pure-JAX reference mirroring the PyTorch forward.
    h = s @ w + b                                # (B, 2C)
    C = x.shape[-1]
    gamma, beta = h[:, :C], h[:, C:]             # (B, C)
    mean = jnp.mean(x, axis=-1, keepdims=True)
    var = jnp.mean((x - mean) ** 2, axis=-1, keepdims=True)
    xn = (x - mean) / jnp.sqrt(var + eps)
    return (1.0 + gamma[:, None, :]) * xn + beta[:, None, :]


if __name__ == "__main__":
    key = jax.random.PRNGKey(0)

    def run_case(B, T, C, S, **kw):
        kx, ks, kwt, kb = jax.random.split(jax.random.fold_in(key, B * 1000 + T), 4)
        x = jax.random.normal(kx, (B, T, C), dtype=jnp.float32)
        s = jax.random.normal(ks, (B, S), dtype=jnp.float32)
        # Linear(style_dim, 2*channels) params (weight transposed to (S, 2C)).
        w = jax.random.normal(kwt, (S, 2 * C), dtype=jnp.float32) * 0.05
        b = jax.random.normal(kb, (2 * C,), dtype=jnp.float32) * 0.05
        out = jax.block_until_ready(ada_layer_norm(x, s, w, b, **kw))
        ref = reference(x, s, w, b)
        assert out.shape == (B, T, C)
        assert jnp.allclose(out, ref, atol=1e-4, rtol=1e-4), "mismatch vs reference"

    # Case 1: lane-dense C, auto tile selection (folds batch into the tile,
    # keeps >= 2 grid steps so the v7x megacore has work to split).
    run_case(B=2, T=64, C=128, S=32)

    # Case 2: C not a multiple of 128 (padded + masked reduction) and T not
    # divisible by the forced block_t (partial last tile relies on masked store).
    run_case(B=3, T=50, C=80, S=32, block_b=1, block_t=16)

    print("KERNEL_OK")
</pallas_src>

<mosaic_0001>
module attributes {stable_mosaic.version = 11 : i64} {
  func.func @ada_layer_norm_kernel(%arg0: i32, %arg1: i32, %arg2: memref<1x64x128xf32, #tpu.memory_space<vmem>>, %arg3: memref<1x1x128xf32, #tpu.memory_space<vmem>>, %arg4: memref<1x1x128xf32, #tpu.memory_space<vmem>>, %arg5: memref<1x64x128xf32, #tpu.memory_space<vmem>>) attributes {dimension_semantics = [#tpu.dimension_semantics<parallel>, #tpu.dimension_semantics<parallel>], iteration_bounds = array<i64: 2, 1>, scalar_prefetch = 0 : i64, scratch_operands = 0 : i64, tpu.core_type = #tpu.core_type<tc>, window_params = [{transform_indices = @transform_0, window_bounds = array<i64: 1, 64, 128>}, {transform_indices = @transform_1, window_bounds = array<i64: 1, 1, 128>}, {transform_indices = @transform_2, window_bounds = array<i64: 1, 1, 128>}, {transform_indices = @transform_3, window_bounds = array<i64: 1, 64, 128>}]} {
    %c0 = arith.constant 0 : index
    %c0_0 = arith.constant 0 : index
    %c0_1 = arith.constant 0 : index
    %0 = vector.load %arg2[%c0, %c0_0, %c0_1] : memref<1x64x128xf32, #tpu.memory_space<vmem>>, vector<1x64x128xf32>
    %cst = arith.constant dense<0.000000e+00> : vector<1x64xf32>
    %1 = vector.multi_reduction <add>, %0, %cst [2] : vector<1x64x128xf32> to vector<1x64xf32>
    %2 = vector.shape_cast %1 : vector<1x64xf32> to vector<1x64x1xf32>
    %cst_2 = arith.constant 1.280000e+02 : f32
    %3 = vector.broadcast %cst_2 : f32 to vector<1x64x1xf32>
    %4 = arith.divf %2, %3 : vector<1x64x1xf32>
    %5 = vector.broadcast %4 : vector<1x64x1xf32> to vector<1x64x128xf32>
    %6 = arith.subf %0, %5 : vector<1x64x128xf32>
    %7 = arith.mulf %6, %6 : vector<1x64x128xf32>
    %cst_3 = arith.constant dense<0.000000e+00> : vector<1x64xf32>
    %8 = vector.multi_reduction <add>, %7, %cst_3 [2] : vector<1x64x128xf32> to vector<1x64xf32>
    %9 = vector.shape_cast %8 : vector<1x64xf32> to vector<1x64x1xf32>
    %cst_4 = arith.constant 1.280000e+02 : f32
    %10 = vector.broadcast %cst_4 : f32 to vector<1x64x1xf32>
    %11 = arith.divf %9, %10 : vector<1x64x1xf32>
    %cst_5 = arith.constant 9.99999974E-6 : f32
    %12 = vector.broadcast %cst_5 : f32 to vector<1x64x1xf32>
    %13 = arith.addf %11, %12 : vector<1x64x1xf32>
    %14 = math.rsqrt %13 : vector<1x64x1xf32>
    %15 = vector.broadcast %14 : vector<1x64x1xf32> to vector<1x64x128xf32>
    %16 = arith.mulf %6, %15 : vector<1x64x128xf32>
    %c0_6 = arith.constant 0 : index
    %c0_7 = arith.constant 0 : index
    %c0_8 = arith.constant 0 : index
    %17 = vector.load %arg3[%c0_6, %c0_7, %c0_8] : memref<1x1x128xf32, #tpu.memory_space<vmem>>, vector<1x1x128xf32>
    %c0_9 = arith.constant 0 : index
    %c0_10 = arith.constant 0 : index
    %c0_11 = arith.constant 0 : index
    %18 = vector.load %arg4[%c0_9, %c0_10, %c0_11] : memref<1x1x128xf32, #tpu.memory_space<vmem>>, vector<1x1x128xf32>
    %19 = vector.broadcast %17 : vector<1x1x128xf32> to vector<1x64x128xf32>
    %20 = arith.mulf %19, %16 : vector<1x64x128xf32>
    %21 = vector.broadcast %18 : vector<1x1x128xf32> to vector<1x64x128xf32>
    %22 = arith.addf %20, %21 : vector<1x64x128xf32>
    %c0_12 = arith.constant 0 : index
    %c0_13 = arith.constant 0 : index
    %c0_14 = arith.constant 0 : index
    %23 = vector.load %arg5[%c0_12, %c0_13, %c0_14] : memref<1x64x128xf32, #tpu.memory_space<vmem>>, vector<1x64x128xf32>
    tpu.vector_store %arg5[%c0_12, %c0_13, %c0_14], %22 {strides = array<i32>} : memref<1x64x128xf32, #tpu.memory_space<vmem>>, vector<1x64x128xf32>,
    return
  }
  func.func @transform_0(%arg0: i32, %arg1: i32) -> (i32, i32, i32) {
    %c0_i32 = arith.constant 0 : i32
    %c0_i32_0 = arith.constant 0 : i32
    return %arg0, %arg1, %c0_i32 : i32, i32, i32
  }
  func.func @transform_1(%arg0: i32, %arg1: i32) -> (i32, i32, i32) {
    %c0_i32 = arith.constant 0 : i32
    %c0_i32_0 = arith.constant 0 : i32
    %c0_i32_1 = arith.constant 0 : i32
    return %arg0, %c0_i32, %c0_i32_0 : i32, i32, i32
  }
  func.func @transform_2(%arg0: i32, %arg1: i32) -> (i32, i32, i32) {
    %c0_i32 = arith.constant 0 : i32
    %c0_i32_0 = arith.constant 0 : i32
    %c0_i32_1 = arith.constant 0 : i32
    return %arg0, %c0_i32, %c0_i32_0 : i32, i32, i32
  }
  func.func @transform_3(%arg0: i32, %arg1: i32) -> (i32, i32, i32) {
    %c0_i32 = arith.constant 0 : i32
    %c0_i32_0 = arith.constant 0 : i32
    return %arg0, %arg1, %c0_i32 : i32, i32, i32
  }
}

</mosaic_0001>

<llo_original>
// kernel: tpu_custom_call.1
$region0: #{tpu_custom_call.1}
  #allocation0 [shape = 'u32[]', space=smem, size = 0x4, offset = 0x4, fixed_abs, tag = 'smem constant byte address 0x4 - core index']
  #allocation1 [shape = 'u32[72,128]{1,0:T(1,128)}', space=vmem, size = 0x9000, scoped, tag = 'internal scratch']
  %s0 = inlined_call_operand.hbm [shape: f32[2,64,128], index: 0, kind: input, shape index: {}]
  %s1 = inlined_call_operand.hbm [shape: f32[2,1,128], index: 1, kind: input, shape index: {}]
  %s2 = inlined_call_operand.hbm [shape: f32[2,1,128], index: 2, kind: input, shape index: {}]
  %s3 = inlined_call_operand.hbm [shape: f32[2,64,128], index: 3, kind: output, shape index: {}]
  %s4 = sld [smem:[#allocation0]]
  $region57: #{tpu_custom_call.1} parent=0
    _
  %s6 = ssub.s32 1, %s4
  %s7 = scalar_select 0, %s6, %s4
  $region1: #{tpu_custom_call.1} parent=0
    #allocation2 [shape = 'u8[65536]{0}', space=vmem, size = 0x10000, scoped, tag = 'input window, operand 0']
    #allocation3 [shape = 's32[2]{0}', space=sflag, size = 0x8, scoped, tag = 'scoped memory for tpu_custom_call.1']
    #allocation4 [shape = 's32[2]{0}', space=sflag, size = 0x8, scoped, tag = 'scoped memory for tpu_custom_call.1']
    #allocation5 [shape = 'u8[1024]{0}', space=vmem, size = 0x400, scoped, tag = 'input window, operand 1']
    #allocation6 [shape = 's32[2]{0}', space=sflag, size = 0x8, scoped, tag = 'scoped memory for tpu_custom_call.1']
    #allocation7 [shape = 'u8[1024]{0}', space=vmem, size = 0x400, scoped, tag = 'input window, operand 2']
    #allocation8 [shape = 'u8[65536]{0}', space=vmem, size = 0x10000, scoped, tag = 'output window, operand 0']
    %8 = vsyncpa [#allocation3], 0
    %s9 = scalar_lea.sflag [#allocation3], 1
    %10 = vsyncpa %s9, 0
    %11 = vsyncpa [#allocation6], 0
    %s12 = scalar_lea.sflag [#allocation6], 1
    %13 = vsyncpa %s12, 0
    %14 = vsyncpa [#allocation4], 0
    %s15 = scalar_lea.sflag [#allocation4], 1
    %16 = vsyncpa %s15, 0
    loop: start=0, step=1, limit=4
    $region2: #{tpu_custom_call.1} parent=1 // loop_pre_header
      _
    $region3: #{tpu_custom_call.1} parent=1 // loop_header
      %s18 = sphi 0, %s22
      %p19 = scmp.ge.s32.totalorder %s18, 4
      %s25 = sphi 0, %s37
      %s26 = sphi 0, %s33
      %s27 = sphi 0, %s25
      %s28 = sphi 0, %s26
      %s29 = sphi 0, %s27
      %s30 = sphi 0, %s28
      %s42 = sphi 0, %s44
      %s45 = sphi 0, %s42
      %s46 = sphi 0, %s45
      %s62 = sphi 0, %s46
      %s68 = sphi 0, %s70
      %s71 = sphi 0, %s68
      %s72 = sphi 0, %s71
      %s88 = sphi 0, %s72
      %s94 = sphi 0, %s96
      %s97 = sphi 0, %s94
      %s98 = sphi 0, %s97
      %s114 = sphi 0, %s98
      %s122 = sphi 0, %s124
      %s125 = sphi 0, %s122
      %s126 = sphi 0, %s125
      %s142 = sphi 0, %s126
    $region4: #{tpu_custom_call.1} parent=1 // loop_header_branch
      %21 = sbr.rel (%p19) target = $region8
    $region5: #{tpu_custom_call.1} parent=1 // loop_body
      %s23 = ssub.s32 %s18, 1
      %s24 = ssub.s32 %s18, 2
      %s31 = sadd.s32 1, %s26
      %p32 = scmp.ge.s32.totalorder %s31, 1
      %s33 = scalar_select %p32, 0, %s31
      %s34 = sadd.s32 1, %s25
      %s35 = scalar_select %p32, %s34, %s25
      %p36 = scmp.ge.s32.totalorder %s35, 2
      %s37 = scalar_select %p36, 0, %s35
      %s38 = ssub.s32 %s25, %s37
      %s39 = ssub.s32 %s26, %s33
      %s40 = sor.u32 %s38, %s39
      %p41 = scmp.eq.s32.totalorder %s40, 0
      %s43 = sadd.s32 %s42, 1
      %s44 = scalar_select %p41, %s42, %s43
      %p47 = pneg %p41
      %p48 = scmp.eq.s32.totalorder %s18, 1
      %p49 = por %p47, %p48
      %p50 = scmp.ne.s32.totalorder %s42, %s45
      %p51 = scmp.eq.s32.totalorder %s18, 0
      %p52 = por %p50, %p51
      %p53 = scmp.ne.s32.totalorder %s42, %s45
      %p54 = scmp.eq.s32.totalorder %s23, 1
      %p55 = por %p53, %p54
      %p56 = scmp.ne.s32.totalorder %s45, %s46
      %p57 = scmp.eq.s32.totalorder %s23, 0
      %p58 = por %p56, %p57
      %p59 = scmp.ne.s32.totalorder %s45, %s46
      %p60 = scmp.eq.s32.totalorder %s24, 1
      %p61 = por %p59, %p60
      %p63 = scmp.ne.s32.totalorder %s46, %s62
      %p64 = scmp.eq.s32.totalorder %s24, 0
      %p65 = por %p63, %p64
      %s66 = ssub.s32 %s25, %s37
      %p67 = scmp.eq.s32.totalorder %s66, 0
      %s69 = sadd.s32 %s68, 1
      %s70 = scalar_select %p67, %s68, %s69
      %p73 = pneg %p67
      %p74 = scmp.eq.s32.totalorder %s18, 1
      %p75 = por %p73, %p74
      %p76 = scmp.ne.s32.totalorder %s68, %s71
      %p77 = scmp.eq.s32.totalorder %s18, 0
      %p78 = por %p76, %p77
      %p79 = scmp.ne.s32.totalorder %s68, %s71
      %p80 = scmp.eq.s32.totalorder %s23, 1
      %p81 = por %p79, %p80
      %p82 = scmp.ne.s32.totalorder %s71, %s72
      %p83 = scmp.eq.s32.totalorder %s23, 0
      %p84 = por %p82, %p83
      %p85 = scmp.ne.s32.totalorder %s71, %s72
      %p86 = scmp.eq.s32.totalorder %s24, 1
      %p87 = por %p85, %p86
      %p89 = scmp.ne.s32.totalorder %s72, %s88
      %p90 = scmp.eq.s32.totalorder %s24, 0
      %p91 = por %p89, %p90
      %s92 = ssub.s32 %s25, %s37
      %p93 = scmp.eq.s32.totalorder %s92, 0
      %s95 = sadd.s32 %s94, 1
      %s96 = scalar_select %p93, %s94, %s95
      %p99 = pneg %p93
      %p100 = scmp.eq.s32.totalorder %s18, 1
      %p101 = por %p99, %p100
      %p102 = scmp.ne.s32.totalorder %s94, %s97
      %p103 = scmp.eq.s32.totalorder %s18, 0
      %p104 = por %p102, %p103
      %p105 = scmp.ne.s32.totalorder %s94, %s97
      %p106 = scmp.eq.s32.totalorder %s23, 1
      %p107 = por %p105, %p106
      %p108 = scmp.ne.s32.totalorder %s97, %s98
      %p109 = scmp.eq.s32.totalorder %s23, 0
      %p110 = por %p108, %p109
      %p111 = scmp.ne.s32.totalorder %s97, %s98
      %p112 = scmp.eq.s32.totalorder %s24, 1
      %p113 = por %p111, %p112
      %p115 = scmp.ne.s32.totalorder %s98, %s114
      %p116 = scmp.eq.s32.totalorder %s24, 0
      %p117 = por %p115, %p116
      %s118 = ssub.s32 %s25, %s37
      %s119 = ssub.s32 %s26, %s33
      %s120 = sor.u32 %s118, %s119
      %p121 = scmp.eq.s32.totalorder %s120, 0
      %s123 = sadd.s32 %s122, 1
      %s124 = scalar_select %p121, %s122, %s123
      %p127 = pneg %p121
      %p128 = scmp.eq.s32.totalorder %s18, 1
      %p129 = por %p127, %p128
      %p130 = scmp.ne.s32.totalorder %s122, %s125
      %p131 = scmp.eq.s32.totalorder %s18, 0
      %p132 = por %p130, %p131
      %p133 = scmp.ne.s32.totalorder %s122, %s125
      %p134 = scmp.eq.s32.totalorder %s23, 1
      %p135 = por %p133, %p134
      %p136 = scmp.ne.s32.totalorder %s125, %s126
      %p137 = scmp.eq.s32.totalorder %s23, 0
      %p138 = por %p136, %p137
      %p139 = scmp.ne.s32.totalorder %s125, %s126
      %p140 = scmp.eq.s32.totalorder %s24, 1
      %p141 = por %p139, %p140
      %p143 = scmp.ne.s32.totalorder %s126, %s142
      %p144 = scmp.eq.s32.totalorder %s24, 0
      %p145 = por %p143, %p144
      %p146 = scmp.le.s32.totalorder 1, %s18
      %p147 = scmp.lt.s32.totalorder %s18, 3
      %p148 = pnand %p146, %p147
      %p149 = pneg %p148
      // Predicated region
      $region9: #{tpu_custom_call.1} parent=5 // pred_check
        _
      $region10: #{tpu_custom_call.1} parent=5 // pred_check_branch
        %151 = sbr.rel (%p148) target = $region12
      $region11: #{tpu_custom_call.1} parent=5 // pred_region
        %s152 = ssub.s32 %s18, 1
      $region12: #{tpu_custom_call.1} parent=5 // pred_fallthru
        _
      %p153 = scmp.lt.s32.totalorder %s18, 2
      // Predicated region
      $region13: #{tpu_custom_call.1} parent=5 // pred_check
        %p154 = pneg %p153
      $region14: #{tpu_custom_call.1} parent=5 // pred_check_branch
        %156 = sbr.rel (%p154) target = $region16
      $region15: #{tpu_custom_call.1} parent=5 // pred_region
        // Predicated region
        $region17: #{tpu_custom_call.1} parent=15 // pred_check
          %p157 = pneg %p52
        $region18: #{tpu_custom_call.1} parent=15 // pred_check_branch
          %159 = sbr.rel (%p157) target = $region20
        $region19: #{tpu_custom_call.1} parent=15 // pred_region
          %s160 = sand.u32 %s42, 1
          %s161 = scalar_lea.sflag [#allocation3], %s160
          %s162 = sand.u32 %s42, 1
          %s163 = smul.addr %s162, 64
          %s164 = scalar_lea.vmem [#allocation2], %s163
          %s165 = smul.u32 8, %s26
          %167 = vsyncadd %s161, 0
          %s168 = smul.addr %s25, 8
          %s169 = sadd.s32 %s165, %s168
          %s170 = smul.addr %s169, 8
          %s171 = scalar_lea.hbm %s0, %s170
          %s172 = sshll.u32 %s171, 4
          %s173 = int_to_ptr.hbm [resolvable:$true] %s172
          %s174 = sshll.u32 %s164, 4
          %s175 = int_to_ptr.vmem [resolvable:$true] %s174
          %180 = dma.hbm_to_vmem [thread:$0]  %s173, 1024, %s175, %s161, 128, 128, 8
        $region20: #{tpu_custom_call.1} parent=15 // pred_fallthru
          _
        // Predicated region
        $region21: #{tpu_custom_call.1} parent=15 // pred_check
          %p181 = pneg %p78
        $region22: #{tpu_custom_call.1} parent=15 // pred_check_branch
          %183 = sbr.rel (%p181) target = $region24
        $region23: #{tpu_custom_call.1} parent=15 // pred_region
          %s184 = sand.u32 %s18, 1
          %s185 = scalar_lea.sflag [#allocation6], %s184
          %s186 = sand.u32 %s68, 1
          %s187 = scalar_lea.vmem [#allocation5], %s186
          %189 = vsyncadd %s185, 0
          %s190 = scalar_lea.hbm %s1, %s25
          %s192 = sshll.u32 %s190, 4
          %s193 = int_to_ptr.hbm [resolvable:$true] %s192
          %s194 = sshll.u32 %s187, 4
          %s195 = int_to_ptr.vmem [resolvable:$true] %s194
          %197 = dma.hbm_to_vmem [thread:$0]  %s193, 16, %s195, %s185
        $region24: #{tpu_custom_call.1} parent=15 // pred_fallthru
          _
        // Predicated region
        $region25: #{tpu_custom_call.1} parent=15 // pred_check
          %p198 = pneg %p104
        $region26: #{tpu_custom_call.1} parent=15 // pred_check_branch
          %200 = sbr.rel (%p198) target = $region28
        $region27: #{tpu_custom_call.1} parent=15 // pred_region
          %s201 = sand.u32 %s18, 1
          %s202 = scalar_lea.sflag [#allocation6], %s201
          %s203 = sand.u32 %s94, 1
          %s204 = scalar_lea.vmem [#allocation7], %s203
          %206 = vsyncadd %s202, 0
          %s207 = scalar_lea.hbm %s2, %s25
          %s209 = sshll.u32 %s207, 4
          %s210 = int_to_ptr.hbm [resolvable:$true] %s209
          %s211 = sshll.u32 %s204, 4
          %s212 = int_to_ptr.vmem [resolvable:$true] %s211
          %214 = dma.hbm_to_vmem [thread:$0]  %s210, 16, %s212, %s202
        $region28: #{tpu_custom_call.1} parent=15 // pred_fallthru
          _
      $region16: #{tpu_custom_call.1} parent=5 // pred_fallthru
        _
      %p215 = scmp.le.s32.totalorder 1, %s18
      %p216 = scmp.lt.s32.totalorder %s18, 3
      %p217 = pnand %p215, %p216
      %p218 = pneg %p217
      // Predicated region
      $region29: #{tpu_custom_call.1} parent=5 // pred_check
        _
      $region30: #{tpu_custom_call.1} parent=5 // pred_check_branch
        %220 = sbr.rel (%p217) target = $region32
      $region31: #{tpu_custom_call.1} parent=5 // pred_region
        %s221 = ssub.s32 %s18, 1
        %s222 = sand.u32 %s45, 1
        %s223 = scalar_lea.sflag [#allocation3], %s222
        %s224 = sand.u32 %s45, 1
        %s225 = smul.addr %s224, 64
        %s226 = scalar_lea.vmem [#allocation2], %s225
        // Predicated region
        $region33: #{tpu_custom_call.1} parent=31 // pred_check
          %p227 = pneg %p58
        $region34: #{tpu_custom_call.1} parent=31 // pred_check_branch
          %229 = sbr.rel (%p227) target = $region36
        $region35: #{tpu_custom_call.1} parent=31 // pred_region
          %231 = dma.done %s223, 1024
        $region36: #{tpu_custom_call.1} parent=31 // pred_fallthru
          _
        %s232 = sand.u32 %s23, 1
        %s233 = scalar_lea.sflag [#allocation6], %s232
        %s234 = sand.u32 %s71, 1
        %s235 = scalar_lea.vmem [#allocation5], %s234
        // Predicated region
        $region37: #{tpu_custom_call.1} parent=31 // pred_check
          %p236 = pneg %p84
        $region38: #{tpu_custom_call.1} parent=31 // pred_check_branch
          %238 = sbr.rel (%p236) target = $region40
        $region39: #{tpu_custom_call.1} parent=31 // pred_region
          %240 = dma.done %s233, 16
        $region40: #{tpu_custom_call.1} parent=31 // pred_fallthru
          _
        %s241 = sand.u32 %s23, 1
        %s242 = scalar_lea.sflag [#allocation6], %s241
        %s243 = sand.u32 %s97, 1
        %s244 = scalar_lea.vmem [#allocation7], %s243
        // Predicated region
        $region41: #{tpu_custom_call.1} parent=31 // pred_check
          %p245 = pneg %p110
        $region42: #{tpu_custom_call.1} parent=31 // pred_check_branch
          %247 = sbr.rel (%p245) target = $region44
        $region43: #{tpu_custom_call.1} parent=31 // pred_region
          %249 = dma.done %s242, 16
        $region44: #{tpu_custom_call.1} parent=31 // pred_fallthru
          _
        %s250 = sand.u32 %s45, 1
        %s251 = scalar_lea.sflag [#allocation3], %s250
        %s252 = sand.u32 %s45, 1
        %s253 = smul.addr %s252, 64
        %s254 = scalar_lea.vmem [#allocation2], %s253
        %p255 = pneg %p58
        %p256 = pneg %p55
        %s257 = sand.u32 %s23, 1
        %s258 = scalar_lea.sflag [#allocation6], %s257
        %s259 = sand.u32 %s71, 1
        %s260 = scalar_lea.vmem [#allocation5], %s259
        %p261 = pneg %p84
        %p262 = pneg %p81
        %s263 = sand.u32 %s23, 1
        %s264 = scalar_lea.sflag [#allocation6], %s263
        %s265 = sand.u32 %s97, 1
        %s266 = scalar_lea.vmem [#allocation7], %s265
        %p267 = pneg %p110
        %p268 = pneg %p107
        %p269 = pneg %p138
        %p270 = pneg %p135
        %s271 = sand.u32 %s125, 1
        %s272 = scalar_lea.sflag [#allocation4], %s271
        %s273 = sand.u32 %s125, 1
        %s274 = smul.addr %s273, 64
        %s275 = scalar_lea.vmem [#allocation8], %s274
        %s276 = smul.u32 8, %s28
        %s277 = smul.u32 8, %s28
        %v278 = vld [vmem:[%s226] sm:$0xff]
        %v279 = vld [vmem:[%s226 + $0x8] sm:$0xff]
        %v280 = vld [vmem:[%s226 + $0x10] sm:$0xff]
        %v281 = vld [vmem:[%s226 + $0x18] sm:$0xff]
        %v282 = vld [vmem:[%s226 + $0x20] sm:$0xff]
        %v283 = vld [vmem:[%s226 + $0x28] sm:$0xff]
        %v284 = vld [vmem:[%s226 + $0x30] sm:$0xff]
        %v285 = vld [vmem:[%s226 + $0x38] sm:$0xff]
        %286 = vadd.xlane.f32.xlu0 %v278
        %v287 = vpop.xlane.xlu0 %286
        %288 = vadd.xlane.f32.xlu0 %v279
        %v289 = vpop.xlane.xlu0 %288
        %290 = vadd.xlane.f32.xlu0 %v280
        %v291 = vpop.xlane.xlu0 %290
        %292 = vadd.xlane.f32.xlu0 %v281
        %v293 = vpop.xlane.xlu0 %292
        %294 = vadd.xlane.f32.xlu0 %v282
        %v295 = vpop.xlane.xlu0 %294
        %296 = vadd.xlane.f32.xlu0 %v283
        %v297 = vpop.xlane.xlu0 %296
        %298 = vadd.xlane.f32.xlu0 %v284
        %v299 = vpop.xlane.xlu0 %298
        %300 = vadd.xlane.f32.xlu0 %v285
        %v301 = vpop.xlane.xlu0 %300
        %v302 = vrcp.pop 128.0
        %v303 = vmul.f32 128.0, %v302
        %v304 = vsub.f32 1.0, %v303
        %v305 = vmul.f32 %v302, %v304
        %v306 = vadd.f32 %v302, %v305
        %vm307 = vweird.f32 %v302
        %v308 = vsel %vm307, %v302, %v306
        %v309 = vmul.f32 %v287, %v308
        %v310 = vmul.f32 %v289, %v308
        %v311 = vmul.f32 %v291, %v308
        %v312 = vmul.f32 %v293, %v308
        %v313 = vmul.f32 %v295, %v308
        %v314 = vmul.f32 %v297, %v308
        %v315 = vmul.f32 %v299, %v308
        %v316 = vmul.f32 %v301, %v308
        %v317 = vsub.f32 %v278, %v309
        %v318 = vsub.f32 %v279, %v310
        %v319 = vsub.f32 %v280, %v311
        %v320 = vsub.f32 %v281, %v312
        %v321 = vsub.f32 %v282, %v313
        %v322 = vsub.f32 %v283, %v314
        %v323 = vsub.f32 %v284, %v315
        %v324 = vsub.f32 %v285, %v316
        %v325 = vmul.f32 %v317, %v317
        %v326 = vmul.f32 %v318, %v318
        %v327 = vmul.f32 %v319, %v319
        %v328 = vmul.f32 %v320, %v320
        %v329 = vmul.f32 %v321, %v321
        %v330 = vmul.f32 %v322, %v322
        %v331 = vmul.f32 %v323, %v323
        %v332 = vmul.f32 %v324, %v324
        %333 = vadd.xlane.f32.xlu0 %v325
        %v334 = vpop.xlane.xlu0 %333
        %335 = vadd.xlane.f32.xlu0 %v326
        %v336 = vpop.xlane.xlu0 %335
        %337 = vadd.xlane.f32.xlu0 %v327
        %v338 = vpop.xlane.xlu0 %337
        %339 = vadd.xlane.f32.xlu0 %v328
        %v340 = vpop.xlane.xlu0 %339
        %341 = vadd.xlane.f32.xlu0 %v329
        %v342 = vpop.xlane.xlu0 %341
        %343 = vadd.xlane.f32.xlu0 %v330
        %v344 = vpop.xlane.xlu0 %343
        %345 = vadd.xlane.f32.xlu0 %v331
        %v346 = vpop.xlane.xlu0 %345
        %347 = vadd.xlane.f32.xlu0 %v332
        %v348 = vpop.xlane.xlu0 %347
        %v349 = vmul.f32 %v334, %v308
        %v350 = vmul.f32 %v336, %v308
        %v351 = vmul.f32 %v338, %v308
        %v352 = vmul.f32 %v340, %v308
        %v353 = vmul.f32 %v342, %v308
        %v354 = vmul.f32 %v344, %v308
        %v355 = vmul.f32 %v346, %v308
        %v356 = vmul.f32 %v348, %v308
        %v357 = vadd.f32 %v349, 1e-05
        %v358 = vadd.f32 %v350, 1e-05
        %v359 = vadd.f32 %v351, 1e-05
        %v360 = vadd.f32 %v352, 1e-05
        %v361 = vadd.f32 %v353, 1e-05
        %v362 = vadd.f32 %v354, 1e-05
        %v363 = vadd.f32 %v355, 1e-05
        %v364 = vadd.f32 %v356, 1e-05
        %v365 = vrsqrt.pop %v357
        %v366 = vmul.f32 %v365, %v357
        %v367 = vmul.f32 %v366, %v365
        %v368 = vmul.f32 0.5, %v367
        %v369 = vsub.f32 1.5, %v368
        %v370 = vmul.f32 %v365, %v369
        %vm371 = vweird.f32 %v357
        %vm372 = vweird.f32 %v365
        %vm373 = vmor %vm371, %vm372
        %v374 = vsel %vm373, %v365, %v370
        %v375 = vrsqrt.pop %v358
        %v376 = vmul.f32 %v375, %v358
        %v377 = vmul.f32 %v376, %v375
        %v378 = vmul.f32 0.5, %v377
        %v379 = vsub.f32 1.5, %v378
        %v380 = vmul.f32 %v375, %v379
        %vm381 = vweird.f32 %v358
        %vm382 = vweird.f32 %v375
        %vm383 = vmor %vm381, %vm382
        %v384 = vsel %vm383, %v375, %v380
        %v385 = vrsqrt.pop %v359
        %v386 = vmul.f32 %v385, %v359
        %v387 = vmul.f32 %v386, %v385
        %v388 = vmul.f32 0.5, %v387
        %v389 = vsub.f32 1.5, %v388
        %v390 = vmul.f32 %v385, %v389
        %vm391 = vweird.f32 %v359
        %vm392 = vweird.f32 %v385
        %vm393 = vmor %vm391, %vm392
        %v394 = vsel %vm393, %v385, %v390
        %v395 = vrsqrt.pop %v360
        %v396 = vmul.f32 %v395, %v360
        %v397 = vmul.f32 %v396, %v395
        %v398 = vmul.f32 0.5, %v397
        %v399 = vsub.f32 1.5, %v398
        %v400 = vmul.f32 %v395, %v399
        %vm401 = vweird.f32 %v360
        %vm402 = vweird.f32 %v395
        %vm403 = vmor %vm401, %vm402
        %v404 = vsel %vm403, %v395, %v400
        %v405 = vrsqrt.pop %v361
        %v406 = vmul.f32 %v405, %v361
        %v407 = vmul.f32 %v406, %v405
        %v408 = vmul.f32 0.5, %v407
        %v409 = vsub.f32 1.5, %v408
        %v410 = vmul.f32 %v405, %v409
        %vm411 = vweird.f32 %v361
        %vm412 = vweird.f32 %v405
        %vm413 = vmor %vm411, %vm412
        %v414 = vsel %vm413, %v405, %v410
        %v415 = vrsqrt.pop %v362
        %v416 = vmul.f32 %v415, %v362
        %v417 = vmul.f32 %v416, %v415
        %v418 = vmul.f32 0.5, %v417
        %v419 = vsub.f32 1.5, %v418
        %v420 = vmul.f32 %v415, %v419
        %vm421 = vweird.f32 %v362
        %vm422 = vweird.f32 %v415
        %vm423 = vmor %vm421, %vm422
        %v424 = vsel %vm423, %v415, %v420
        %v425 = vrsqrt.pop %v363
        %v426 = vmul.f32 %v425, %v363
        %v427 = vmul.f32 %v426, %v425
        %v428 = vmul.f32 0.5, %v427
        %v429 = vsub.f32 1.5, %v428
        %v430 = vmul.f32 %v425, %v429
        %vm431 = vweird.f32 %v363
        %vm432 = vweird.f32 %v425
        %vm433 = vmor %vm431, %vm432
        %v434 = vsel %vm433, %v425, %v430
        %v435 = vrsqrt.pop %v364
        %v436 = vmul.f32 %v435, %v364
        %v437 = vmul.f32 %v436, %v435
        %v438 = vmul.f32 0.5, %v437
        %v439 = vsub.f32 1.5, %v438
        %v440 = vmul.f32 %v435, %v439
        %vm441 = vweird.f32 %v364
        %vm442 = vweird.f32 %v435
        %vm443 = vmor %vm441, %vm442
        %v444 = vsel %vm443, %v435, %v440
        %v445 = vmul.f32 %v317, %v374
        %v446 = vmul.f32 %v318, %v384
        %v447 = vmul.f32 %v319, %v394
        %v448 = vmul.f32 %v320, %v404
        %v449 = vmul.f32 %v321, %v414
        %v450 = vmul.f32 %v322, %v424
        %v451 = vmul.f32 %v323, %v434
        %v452 = vmul.f32 %v324, %v444
        %v453 = vld [vmem:[%s235] sm:$0x1]
        %v454 = vld [vmem:[%s244] sm:$0x1]
        %v456 = vperm.slane %v453, 0
        %v458 = vmul.f32 %v456, %v445
        %v459 = vmul.f32 %v456, %v446
        %v460 = vmul.f32 %v456, %v447
        %v461 = vmul.f32 %v456, %v448
        %v462 = vmul.f32 %v456, %v449
        %v463 = vmul.f32 %v456, %v450
        %v464 = vmul.f32 %v456, %v451
        %v465 = vmul.f32 %v456, %v452
        %v467 = vperm.slane %v454, 0
        %v469 = vadd.f32 %v458, %v467
        %v470 = vadd.f32 %v459, %v467
        %v471 = vadd.f32 %v460, %v467
        %v472 = vadd.f32 %v461, %v467
        %v473 = vadd.f32 %v462, %v467
        %v474 = vadd.f32 %v463, %v467
        %v475 = vadd.f32 %v464, %v467
        %v476 = vadd.f32 %v465, %v467
        %477 = vst [vmem:[%s275] sm:$0xff] %v469
        %478 = vst [vmem:[%s275 + $0x8] sm:$0xff] %v470
        %479 = vst [vmem:[%s275 + $0x10] sm:$0xff] %v471
        %480 = vst [vmem:[%s275 + $0x18] sm:$0xff] %v472
        %481 = vst [vmem:[%s275 + $0x20] sm:$0xff] %v473
        %482 = vst [vmem:[%s275 + $0x28] sm:$0xff] %v474
        %483 = vst [vmem:[%s275 + $0x30] sm:$0xff] %v475
        %484 = vst [vmem:[%s275 + $0x38] sm:$0xff] %v476
        %s485 = sand.u32 %s125, 1
        %s486 = scalar_lea.sflag [#allocation4], %s485
        %s487 = sand.u32 %s125, 1
        %s488 = smul.addr %s487, 64
        %s489 = scalar_lea.vmem [#allocation8], %s488
        // Predicated region
        $region45: #{tpu_custom_call.1} parent=31 // pred_check
          %p490 = pneg %p135
        $region46: #{tpu_custom_call.1} parent=31 // pred_check_branch
          %492 = sbr.rel (%p490) target = $region48
        $region47: #{tpu_custom_call.1} parent=31 // pred_region
          %s493 = smul.u32 8, %s28
          %495 = vsyncadd %s486, 0
          %s496 = smul.addr %s27, 8
          %s497 = sadd.s32 %s493, %s496
          %s498 = smul.addr %s497, 8
          %s499 = scalar_lea.hbm %s3, %s498
          %s500 = sshll.u32 %s489, 4
          %s501 = int_to_ptr.vmem [resolvable:$true] %s500
          %s502 = sshll.u32 %s499, 4
          %s503 = int_to_ptr.hbm [resolvable:$true] %s502
          %508 = dma.vmem_to_hbm [thread:$0]  %s501, 1024, %s503, %s486, 128, 128, 8
        $region48: #{tpu_custom_call.1} parent=31 // pred_fallthru
          _
      $region32: #{tpu_custom_call.1} parent=5 // pred_fallthru
        _
      %p509 = scmp.le.s32.totalorder 2, %s18
      // Predicated region
      $region49: #{tpu_custom_call.1} parent=5 // pred_check
        %p510 = pneg %p509
      $region50: #{tpu_custom_call.1} parent=5 // pred_check_branch
        %512 = sbr.rel (%p510) target = $region52
      $region51: #{tpu_custom_call.1} parent=5 // pred_region
        %s513 = ssub.s32 %s18, 2
        // Predicated region
        $region53: #{tpu_custom_call.1} parent=51 // pred_check
          %p514 = pneg %p141
        $region54: #{tpu_custom_call.1} parent=51 // pred_check_branch
          %516 = sbr.rel (%p514) target = $region56
        $region55: #{tpu_custom_call.1} parent=51 // pred_region
          %s517 = sand.u32 %s126, 1
          %s518 = scalar_lea.sflag [#allocation4], %s517
          %s519 = sand.u32 %s126, 1
          %s520 = smul.addr %s519, 64
          %s521 = scalar_lea.vmem [#allocation8], %s520
          %523 = dma.done %s518, 1024
        $region56: #{tpu_custom_call.1} parent=51 // pred_fallthru
          _
      $region52: #{tpu_custom_call.1} parent=5 // pred_fallthru
        _
    $region6: #{tpu_custom_call.1} parent=1 // loop_footer
      %s22 = sadd.s32 1, %s18
    $region7: #{tpu_custom_call.1} parent=1 // loop_footer_branch
      %17 = sbr.rel target = $region3
    $region8: #{tpu_custom_call.1} parent=1 // loop_exit
      _
    %524 = vsyncpa [#allocation3], 1
    %s525 = scalar_lea.sflag [#allocation3], 1
    %526 = vsyncpa %s525, 1
    %527 = vsyncpa [#allocation6], 1
    %s528 = scalar_lea.sflag [#allocation6], 1
    %529 = vsyncpa %s528, 1
    %530 = vsyncpa [#allocation4], 1
    %s531 = scalar_lea.sflag [#allocation4], 1
    %532 = vsyncpa %s531, 1

</llo_original>
